<compile_context>
chip_gen: v5e
topology: v5e:2x2
jax: 0.10.0
libtpu: 0.0.40
codegen_flags: <defaults>
</compile_context>

<pallas_src>
import jax
import jax.numpy as jnp
import numpy as np
from jax.experimental import pallas as pl
from jax.experimental.pallas import tpu as pltpu


# ----------------------------------------------------------------------------
# Generation-aware VMEM budgets
# ----------------------------------------------------------------------------
def _vmem_budgets():
    cap = 64 * 1024 * 1024
    try:
        info = pltpu.get_tpu_info()
        cap = int(getattr(info, "vmem_capacity_bytes", None)
                  or getattr(info, "vmem_size_bytes", cap))
    except Exception:
        pass  # conservative 64 MiB default works on every generation
    if cap <= 64 * 1024 * 1024:                 # v7x-class: 64 MiB physical VMEM
        return 24 * 1024 * 1024, 40 * 1024 * 1024
    return 80 * 1024 * 1024, 104 * 1024 * 1024  # v5e / v6e: 128 MiB physical


# ----------------------------------------------------------------------------
# Kernel 1: node input MLP (+ optional x_h emit) fused with graph readout
#   x_h         = (x @ Wx + bx) * node_mask
#   graph_token = (LayerNorm(mean_N(x_h)) * gamma + beta) @ w_out + b_out
# ----------------------------------------------------------------------------
def _node_hidden(x_ref, wx_ref, bx_ref, m_ref):
    TB, N, Fx = x_ref.shape
    H = wx_ref.shape[1]
    x2 = x_ref[...].astype(jnp.float32).reshape(TB * N, Fx)
    h = jnp.dot(x2, wx_ref[...], preferred_element_type=jnp.float32) + bx_ref[...]
    return h.reshape(TB, N, H) * m_ref[...]


def _graph_readout(h, gamma, beta, w_out, b_out):
    # h: (TB, N, H) masked hidden states (f32).
    # NOTE: matches the PyTorch module exactly: x.mean(dim=1) divides by N,
    # including padded nodes (it is NOT a masked mean).
    gt = jnp.mean(h, axis=1)                                    # (TB, H)
    mu = jnp.mean(gt, axis=-1, keepdims=True)
    var = jnp.mean((gt - mu) ** 2, axis=-1, keepdims=True)      # biased (nn.LayerNorm)
    normed = (gt - mu) * jax.lax.rsqrt(var + 1e-5)
    normed = normed * gamma + beta                              # (1,H) broadcasts
    # H -> 1 projection as a VPU reduce (a K=H, N=1 dot gains nothing on the MXU).
    return jnp.sum(normed * w_out, axis=-1, keepdims=True) + b_out   # (TB, 1)


def node_readout_kernel(x_ref, wx_ref, bx_ref, m_ref, g_ref, bta_ref,
                        wo_ref, bo_ref, gt_ref):
    # 0-layer path: x_h is dead downstream -> never written to HBM.
    h = _node_hidden(x_ref, wx_ref, bx_ref, m_ref)
    out = _graph_readout(h, g_ref[...], bta_ref[...], wo_ref[...], bo_ref[...])
    gt_ref[...] = out.reshape(out.shape[0], 1, 1).astype(gt_ref.dtype)


def node_full_kernel(x_ref, wx_ref, bx_ref, m_ref, g_ref, bta_ref,
                     wo_ref, bo_ref, xh_ref, gt_ref):
    h = _node_hidden(x_ref, wx_ref, bx_ref, m_ref)
    xh_ref[...] = h.astype(xh_ref.dtype)
    out = _graph_readout(h, g_ref[...], bta_ref[...], wo_ref[...], bo_ref[...])
    gt_ref[...] = out.reshape(out.shape[0], 1, 1).astype(gt_ref.dtype)


def _node_batch_tile(B, N, H, budget_bytes=8 * 1024 * 1024):
    """Batch rows per grid step (amortize ~0.35us/step overhead)."""
    per_row = 4 * N * H * 2 + 4 * N * (H + 8)   # x_h block (2 bufs) + x/mask blocks
    tb = max(1, min(B, budget_bytes // max(per_row, 1)))
    while B % tb:
        tb -= 1
    return tb


def node_in_readout(x, w_x, b_x, node_mask, gamma, beta, w_out, b_out,
                    emit_xh=False):
    B, N, Fx = x.shape
    H = w_x.shape[1]
    TB = _node_batch_tile(B, N, H)
    m3 = node_mask.reshape(B, N, 1).astype(jnp.float32)

    in_specs = [
        pl.BlockSpec((TB, N, Fx), lambda b: (b, 0, 0)),
        pl.BlockSpec((Fx, H), lambda b: (0, 0)),
        pl.BlockSpec((1, H), lambda b: (0, 0)),
        pl.BlockSpec((TB, N, 1), lambda b: (b, 0, 0)),
        pl.BlockSpec((1, H), lambda b: (0, 0)),
        pl.BlockSpec((1, H), lambda b: (0, 0)),
        pl.BlockSpec((1, H), lambda b: (0, 0)),
        pl.BlockSpec((1, 1), lambda b: (0, 0)),
    ]
    gt_spec = pl.BlockSpec((TB, 1, 1), lambda b: (b, 0, 0))
    gt_shape = jax.ShapeDtypeStruct((B, 1, 1), jnp.float32)
    args = (x, w_x, b_x.reshape(1, H), m3, gamma.reshape(1, H),
            beta.reshape(1, H), w_out.reshape(1, H), b_out.reshape(1, 1))
    cp = pltpu.CompilerParams(dimension_semantics=("parallel",))

    if emit_xh:
        x_h, gt = pl.pallas_call(
            node_full_kernel,
            out_shape=(jax.ShapeDtypeStruct((B, N, H), jnp.float32), gt_shape),
            grid=(B // TB,),
            in_specs=in_specs,
            out_specs=(pl.BlockSpec((TB, N, H), lambda b: (b, 0, 0)), gt_spec),
            compiler_params=cp,
        )(*args)
        return x_h, gt.reshape(B, 1)

    gt = pl.pallas_call(
        node_readout_kernel,
        out_shape=gt_shape,
        grid=(B // TB,),
        in_specs=in_specs,
        out_specs=gt_spec,
        compiler_params=cp,
    )(*args)
    return gt.reshape(B, 1)


# ----------------------------------------------------------------------------
# Kernel 2: edge input MLP, row-tiled, input-side symmetrization, masking
#   e_sym = (e + e^T_{nodes}) / 2            (on Fe channels, pre-matmul)
#   e_h   = (e_sym @ We + be) * m_i * m_j
# ----------------------------------------------------------------------------
def edge_in_resident_kernel(e_ref, w_ref, b_ref, mr_ref, mf_ref, o_ref):
    # e_ref : (1, N, N, Fe)  per-batch-resident (only re-DMAed when b changes)
    # w_ref : (Fe, H)   b_ref: (1, H)
    # mr_ref: (1, TN, 1) row-mask block   mf_ref: (1, N, 1) full mask
    # o_ref : (1, TN, N*H)  lane-dense output slab
    N, Fe = e_ref.shape[1], e_ref.shape[3]
    TN = mr_ref.shape[1]
    H = w_ref.shape[1]
    start = pl.program_id(1) * TN
    if TN % 8 == 0:
        start = pl.multiple_of(start, 8)
    er = e_ref[0, pl.ds(start, TN), :, :].astype(jnp.float32)       # (TN, N, Fe)
    ec = e_ref[0, :, pl.ds(start, TN), :].astype(jnp.float32)       # (N, TN, Fe)
    # Symmetrize on the Fe(=4)-channel input (linearity): ~H/Fe less transposed
    # data than transposing the H-channel output.
    e_sym = (er + jnp.transpose(ec, (1, 0, 2))) * 0.5
    h = jnp.dot(e_sym.reshape(TN * N, Fe), w_ref[...],
                preferred_element_type=jnp.float32) + b_ref[...]
    h = h.reshape(TN, N, H)
    mprod = mr_ref[0][:, None, :] * mf_ref[0][None, :, :]           # fused mask: 1 VPU pass
    h = h * mprod
    o_ref[0] = h.reshape(TN, N * H).astype(o_ref.dtype)


def edge_in_dual_kernel(er_ref, ec_ref, w_ref, b_ref, mr_ref, mf_ref, o_ref):
    # Fallback for N too large for a resident e[b] block: row + strided column
    # blocks are DMAed separately (e read twice per batch).
    TN, N, Fe = er_ref.shape[1], er_ref.shape[2], er_ref.shape[3]
    H = w_ref.shape[1]
    e_sym = (er_ref[0].astype(jnp.float32)
             + jnp.transpose(ec_ref[0].astype(jnp.float32), (1, 0, 2))) * 0.5
    h = jnp.dot(e_sym.reshape(TN * N, Fe), w_ref[...],
                preferred_element_type=jnp.float32) + b_ref[...]
    h = h.reshape(TN, N, H)
    h = h * (mr_ref[0][:, None, :] * mf_ref[0][None, :, :])
    o_ref[0] = h.reshape(TN, N * H).astype(o_ref.dtype)


def _edge_row_tile(N, Fe, H, out_itemsize, budget_bytes, resident,
                   min_row_tiles=1):
    """Largest row tile TN (multiple of 8 dividing N, or N itself) in budget."""
    cands = sorted(set([d for d in range(8, N + 1, 8) if N % d == 0] + [N]))

    def block_bytes(tn):
        out_b = 2 * tn * N * H * out_itemsize                 # output block, 2 buffers
        mask_b = 2 * 4 * (tn + N)
        in_b = 2 * N * N * Fe * 4 if resident else 2 * 2 * tn * N * Fe * 4
        return out_b + mask_b + in_b

    ok = [t for t in cands if block_bytes(t) <= budget_bytes]
    ok_par = [t for t in ok if (N // t) >= min_row_tiles]
    if ok_par:
        return max(ok_par)
    if ok:
        return max(ok)
    return cands[0]   # smallest legal tile; no partial-tile path, so best effort


def edge_in(e, w, b, node_mask, out_dtype=jnp.float32, force_dual=False):
    B, N, _, Fe = e.shape
    H = w.shape[1]
    budget, vmem_limit = _vmem_budgets()
    out_isz = np.dtype(out_dtype).itemsize
    # Resident-e[b] path only if its (double-buffered) block leaves >= half the
    # budget for the output block.
    resident = (not force_dual) and (2 * N * N * Fe * 4 <= budget // 2)
    min_tiles = 2 if B < 2 else 1            # give both v7x TensorCores work
    TN = _edge_row_tile(N, Fe, H, out_isz, budget, resident, min_tiles)
    m3 = node_mask.reshape(B, N, 1).astype(jnp.float32)
    b2 = b.reshape(1, H)
    grid = (B, N // TN)
    # Lane-dense output: (B, N, N*H) slab layout, reshaped back for free below.
    out_shape = jax.ShapeDtypeStruct((B, N, N * H), out_dtype)
    out_spec = pl.BlockSpec((1, TN, N * H), lambda bb, i: (bb, i, 0))
    cp = pltpu.CompilerParams(dimension_semantics=("parallel", "parallel"),
                              vmem_limit_bytes=vmem_limit)

    if resident:
        out = pl.pallas_call(
            edge_in_resident_kernel, out_shape=out_shape, grid=grid,
            in_specs=[
                pl.BlockSpec((1, N, N, Fe), lambda bb, i: (bb, 0, 0, 0)),  # resident e[b]
                pl.BlockSpec((Fe, H), lambda bb, i: (0, 0)),
                pl.BlockSpec((1, H), lambda bb, i: (0, 0)),
                pl.BlockSpec((1, TN, 1), lambda bb, i: (bb, i, 0)),
                pl.BlockSpec((1, N, 1), lambda bb, i: (bb, 0, 0)),
            ],
            out_specs=out_spec, compiler_params=cp,
        )(e, w, b2, m3, m3)
    else:
        out = pl.pallas_call(
            edge_in_dual_kernel, out_shape=out_shape, grid=grid,
            in_specs=[
                pl.BlockSpec((1, TN, N, Fe), lambda bb, i: (bb, i, 0, 0)),  # row block
                pl.BlockSpec((1, N, TN, Fe), lambda bb, i: (bb, 0, i, 0)),  # col block
                pl.BlockSpec((Fe, H), lambda bb, i: (0, 0)),
                pl.BlockSpec((1, H), lambda bb, i: (0, 0)),
                pl.BlockSpec((1, TN, 1), lambda bb, i: (bb, i, 0)),
                pl.BlockSpec((1, N, 1), lambda bb, i: (bb, 0, 0)),
            ],
            out_specs=out_spec, compiler_params=cp,
        )(e, e, w, b2, m3, m3)
    return out.reshape(B, N, N, H)


# ----------------------------------------------------------------------------
# Full forward
# ----------------------------------------------------------------------------
def gt_regression_forward(params, x, e, node_mask, num_transformer_layers=0):
    if num_transformer_layers == 0:
        # x_h and e_h have no consumers: neither HBM stream is emitted.
        return node_in_readout(x, params["w_in_x"], params["b_in_x"], node_mask,
                               params["ln_gamma"], params["ln_beta"],
                               params["w_out"], params["b_out"], emit_xh=False)
    # TODO(synk): Graph_Transformer_Layer is not defined in the provided source;
    # the stack that would consume (x_h, e_h) is omitted, so graph_token below
    # reflects 0-layer semantics.
    x_h, graph_token = node_in_readout(
        x, params["w_in_x"], params["b_in_x"], node_mask,
        params["ln_gamma"], params["ln_beta"], params["w_out"], params["b_out"],
        emit_xh=True)
    e_h = edge_in(e, params["w_in_e"], params["b_in_e"], node_mask)
    del x_h, e_h
    return graph_token


def reference_forward(params, x, e, node_mask):
    """Pure-jnp reference mirroring the PyTorch semantics."""
    m = node_mask.astype(jnp.float32)[..., None]                     # (B, N, 1)
    xh = x @ params["w_in_x"] + params["b_in_x"]
    xh = xh * m
    eh = e @ params["w_in_e"] + params["b_in_e"]
    eh = (eh + jnp.transpose(eh, (0, 2, 1, 3))) / 2.0
    eh = eh * m[:, :, None, :] * m[:, None, :, :]
    gt = xh.mean(axis=1)
    mu = gt.mean(axis=-1, keepdims=True)
    var = ((gt - mu) ** 2).mean(axis=-1, keepdims=True)
    gt = (gt - mu) / jnp.sqrt(var + 1e-5) * params["ln_gamma"] + params["ln_beta"]
    gt = gt @ params["w_out"] + params["b_out"]
    return xh, eh, gt


if __name__ == "__main__":
    # Small shapes implied by the forward:
    B, N = 2, 8            # batch, num nodes
    Fx, Fe = 4, 4          # num_node_type, num_edge_type
    H = 32                 # hidden_dim

    key = jax.random.PRNGKey(0)
    kx, ke, kp = jax.random.split(key, 3)
    x = jax.random.normal(kx, (B, N, Fx), dtype=jnp.float32)
    e = jax.random.normal(ke, (B, N, N, Fe), dtype=jnp.float32)
    # 0/1 node mask: first 6 nodes valid in graph 0, first 5 in graph 1
    node_mask = jnp.stack([
        (jnp.arange(N) < 6).astype(jnp.float32),
        (jnp.arange(N) < 5).astype(jnp.float32),
    ])

    # Deterministic parameter init (synthetic, not a checkpoint load).
    k1, k2, k3, k4, k5, k6 = jax.random.split(kp, 6)
    params = {
        "w_in_x": jax.random.normal(k1, (Fx, H), dtype=jnp.float32) * 0.1,
        "b_in_x": jax.random.normal(k2, (H,), dtype=jnp.float32) * 0.01,
        "w_in_e": jax.random.normal(k3, (Fe, H), dtype=jnp.float32) * 0.1,
        "b_in_e": jax.random.normal(k4, (H,), dtype=jnp.float32) * 0.01,
        "ln_gamma": jnp.ones((H,), dtype=jnp.float32),
        "ln_beta": jnp.zeros((H,), dtype=jnp.float32),
        "w_out": jax.random.normal(k5, (H, 1), dtype=jnp.float32) * 0.1,
        "b_out": jax.random.normal(k6, (1,), dtype=jnp.float32) * 0.01,
    }

    ref_xh, ref_eh, ref_gt = reference_forward(params, x, e, node_mask)

    # Forward (0 layers): graph-token-only kernel, no x_h / e_h HBM traffic.
    out = gt_regression_forward(params, x, e, node_mask)
    out = jax.block_until_ready(out)
    assert out.shape == (B, 1)
    assert jnp.allclose(out, ref_gt, atol=1e-4), (out, ref_gt)

    # Standalone check of the emit_xh variant (layer>0 path).
    x_h, gt = node_in_readout(x, params["w_in_x"], params["b_in_x"], node_mask,
                              params["ln_gamma"], params["ln_beta"],
                              params["w_out"], params["b_out"], emit_xh=True)
    x_h = jax.block_until_ready(x_h)
    assert jnp.allclose(x_h, ref_xh, atol=1e-4)
    assert jnp.allclose(gt, ref_gt, atol=1e-4)

    # Edge kernel: resident-e[b] path (single e read, lane-dense f32 stores).
    e_h = jax.block_until_ready(edge_in(e, params["w_in_e"], params["b_in_e"],
                                        node_mask))
    assert e_h.shape == (B, N, N, H)
    assert jnp.allclose(e_h, ref_eh, atol=1e-4)

    # Edge kernel: dual-DMA fallback path (used when e[b] exceeds the budget).
    e_h_dual = jax.block_until_ready(edge_in(e, params["w_in_e"],
                                             params["b_in_e"], node_mask,
                                             force_dual=True))
    assert jnp.allclose(e_h_dual, ref_eh, atol=1e-4)

    # Edge kernel: bf16 output option (f32 accumulation, half the store bytes).
    e_h_bf16 = jax.block_until_ready(edge_in(e, params["w_in_e"],
                                             params["b_in_e"], node_mask,
                                             out_dtype=jnp.bfloat16))
    assert e_h_bf16.dtype == jnp.bfloat16
    assert jnp.allclose(e_h_bf16.astype(jnp.float32), ref_eh, atol=2e-2)

    print("KERNEL_OK")
</pallas_src>

<mosaic_0001>
module attributes {stable_mosaic.version = 11 : i64} {
  func.func @node_readout_kernel(%arg0: i32, %arg1: memref<2x8x4xf32, #tpu.memory_space<vmem>>, %arg2: memref<4x32xf32, #tpu.memory_space<vmem>>, %arg3: memref<1x32xf32, #tpu.memory_space<vmem>>, %arg4: memref<2x8x1xf32, #tpu.memory_space<vmem>>, %arg5: memref<1x32xf32, #tpu.memory_space<vmem>>, %arg6: memref<1x32xf32, #tpu.memory_space<vmem>>, %arg7: memref<1x32xf32, #tpu.memory_space<vmem>>, %arg8: memref<1x1xf32, #tpu.memory_space<vmem>>, %arg9: memref<2x1x1xf32, #tpu.memory_space<vmem>>) attributes {dimension_semantics = [#tpu.dimension_semantics<parallel>], iteration_bounds = array<i64: 1>, scalar_prefetch = 0 : i64, scratch_operands = 0 : i64, tpu.core_type = #tpu.core_type<tc>, window_params = [{transform_indices = @transform_0, window_bounds = array<i64: 2, 8, 4>}, {pipeline_mode = #tpu.pipeline_mode<synchronous>, transform_indices = @transform_1, window_bounds = array<i64: 4, 32>}, {pipeline_mode = #tpu.pipeline_mode<synchronous>, transform_indices = @transform_2, window_bounds = array<i64: 1, 32>}, {transform_indices = @transform_3, window_bounds = array<i64: 2, 8, 1>}, {pipeline_mode = #tpu.pipeline_mode<synchronous>, transform_indices = @transform_4, window_bounds = array<i64: 1, 32>}, {pipeline_mode = #tpu.pipeline_mode<synchronous>, transform_indices = @transform_5, window_bounds = array<i64: 1, 32>}, {pipeline_mode = #tpu.pipeline_mode<synchronous>, transform_indices = @transform_6, window_bounds = array<i64: 1, 32>}, {pipeline_mode = #tpu.pipeline_mode<synchronous>, transform_indices = @transform_7, window_bounds = array<i64: 1, 1>}, {transform_indices = @transform_8, window_bounds = array<i64: 2, 1, 1>}]} {
    %c0 = arith.constant 0 : index
    %c0_0 = arith.constant 0 : index
    %c0_1 = arith.constant 0 : index
    %0 = vector.load %arg1[%c0, %c0_0, %c0_1] : memref<2x8x4xf32, #tpu.memory_space<vmem>>, vector<2x8x4xf32>
    %1 = vector.shape_cast %0 : vector<2x8x4xf32> to vector<16x4xf32>
    %c0_2 = arith.constant 0 : index
    %c0_3 = arith.constant 0 : index
    %2 = vector.load %arg2[%c0_2, %c0_3] : memref<4x32xf32, #tpu.memory_space<vmem>>, vector<4x32xf32>
    %cst = arith.constant dense<0.000000e+00> : vector<16x32xf32>
    %3 = tpu.matmul %1, %2, %cst {dimension_numbers = #tpu.dot_dimension_numbers<[1], [0], [0], [1], [0, 0, 1, 1], [], []>} : vector<16x4xf32>, vector<4x32xf32>, vector<16x32xf32> -> vector<16x32xf32>
    %c0_4 = arith.constant 0 : index
    %c0_5 = arith.constant 0 : index
    %4 = vector.load %arg3[%c0_4, %c0_5] : memref<1x32xf32, #tpu.memory_space<vmem>>, vector<1x32xf32>
    %5 = vector.broadcast %4 : vector<1x32xf32> to vector<16x32xf32>
    %6 = arith.addf %3, %5 : vector<16x32xf32>
    %7 = vector.shape_cast %6 : vector<16x32xf32> to vector<2x8x32xf32>
    %c0_6 = arith.constant 0 : index
    %c0_7 = arith.constant 0 : index
    %c0_8 = arith.constant 0 : index
    %8 = vector.load %arg4[%c0_6, %c0_7, %c0_8] : memref<2x8x1xf32, #tpu.memory_space<vmem>>, vector<2x8x1xf32>
    %9 = vector.broadcast %8 : vector<2x8x1xf32> to vector<2x8x32xf32>
    %10 = arith.mulf %7, %9 : vector<2x8x32xf32>
    %c0_9 = arith.constant 0 : index
    %c0_10 = arith.constant 0 : index
    %11 = vector.load %arg5[%c0_9, %c0_10] : memref<1x32xf32, #tpu.memory_space<vmem>>, vector<1x32xf32>
    %c0_11 = arith.constant 0 : index
    %c0_12 = arith.constant 0 : index
    %12 = vector.load %arg6[%c0_11, %c0_12] : memref<1x32xf32, #tpu.memory_space<vmem>>, vector<1x32xf32>
    %c0_13 = arith.constant 0 : index
    %c0_14 = arith.constant 0 : index
    %13 = vector.load %arg7[%c0_13, %c0_14] : memref<1x32xf32, #tpu.memory_space<vmem>>, vector<1x32xf32>
    %c0_15 = arith.constant 0 : index
    %c0_16 = arith.constant 0 : index
    %14 = vector.load %arg8[%c0_15, %c0_16] : memref<1x1xf32, #tpu.memory_space<vmem>>, vector<1x1xf32>
    %cst_17 = arith.constant dense<0.000000e+00> : vector<2x32xf32>
    %15 = vector.multi_reduction <add>, %10, %cst_17 [1] : vector<2x8x32xf32> to vector<2x32xf32>
    %cst_18 = arith.constant 8.000000e+00 : f32
    %16 = vector.broadcast %cst_18 : f32 to vector<2x32xf32>
    %17 = arith.divf %15, %16 : vector<2x32xf32>
    %cst_19 = arith.constant dense<0.000000e+00> : vector<2xf32>
    %18 = vector.multi_reduction <add>, %17, %cst_19 [1] : vector<2x32xf32> to vector<2xf32>
    %19 = vector.shape_cast %18 : vector<2xf32> to vector<2x1xf32>
    %cst_20 = arith.constant 3.200000e+01 : f32
    %20 = vector.broadcast %cst_20 : f32 to vector<2x1xf32>
    %21 = arith.divf %19, %20 : vector<2x1xf32>
    %22 = vector.broadcast %21 : vector<2x1xf32> to vector<2x32xf32>
    %23 = arith.subf %17, %22 : vector<2x32xf32>
    %24 = arith.mulf %23, %23 : vector<2x32xf32>
    %cst_21 = arith.constant dense<0.000000e+00> : vector<2xf32>
    %25 = vector.multi_reduction <add>, %24, %cst_21 [1] : vector<2x32xf32> to vector<2xf32>
    %26 = vector.shape_cast %25 : vector<2xf32> to vector<2x1xf32>
    %cst_22 = arith.constant 3.200000e+01 : f32
    %27 = vector.broadcast %cst_22 : f32 to vector<2x1xf32>
    %28 = arith.divf %26, %27 : vector<2x1xf32>
    %29 = vector.broadcast %21 : vector<2x1xf32> to vector<2x32xf32>
    %30 = arith.subf %17, %29 : vector<2x32xf32>
    %cst_23 = arith.constant 9.99999974E-6 : f32
    %31 = vector.broadcast %cst_23 : f32 to vector<2x1xf32>
    %32 = arith.addf %28, %31 : vector<2x1xf32>
    %33 = math.rsqrt %32 : vector<2x1xf32>
    %34 = vector.broadcast %33 : vector<2x1xf32> to vector<2x32xf32>
    %35 = arith.mulf %30, %34 : vector<2x32xf32>
    %36 = vector.broadcast %11 : vector<1x32xf32> to vector<2x32xf32>
    %37 = arith.mulf %35, %36 : vector<2x32xf32>
    %38 = vector.broadcast %12 : vector<1x32xf32> to vector<2x32xf32>
    %39 = arith.addf %37, %38 : vector<2x32xf32>
    %40 = vector.broadcast %13 : vector<1x32xf32> to vector<2x32xf32>
    %41 = arith.mulf %39, %40 : vector<2x32xf32>
    %cst_24 = arith.constant dense<0.000000e+00> : vector<2xf32>
    %42 = vector.multi_reduction <add>, %41, %cst_24 [1] : vector<2x32xf32> to vector<2xf32>
    %43 = vector.shape_cast %42 : vector<2xf32> to vector<2x1xf32>
    %44 = vector.broadcast %14 : vector<1x1xf32> to vector<2x1xf32>
    %45 = arith.addf %43, %44 : vector<2x1xf32>
    %46 = vector.shape_cast %45 : vector<2x1xf32> to vector<2x1x1xf32>
    %c0_25 = arith.constant 0 : index
    %c0_26 = arith.constant 0 : index
    %c0_27 = arith.constant 0 : index
    %47 = vector.load %arg9[%c0_25, %c0_26, %c0_27] : memref<2x1x1xf32, #tpu.memory_space<vmem>>, vector<2x1x1xf32>
    tpu.vector_store %arg9[%c0_25, %c0_26, %c0_27], %46 {strides = array<i32>} : memref<2x1x1xf32, #tpu.memory_space<vmem>>, vector<2x1x1xf32>,
    return
  }
  func.func @transform_0(%arg0: i32) -> (i32, i32, i32) {
    %c0_i32 = arith.constant 0 : i32
    %c0_i32_0 = arith.constant 0 : i32
    %c0_i32_1 = arith.constant 0 : i32
    return %arg0, %c0_i32, %c0_i32_0 : i32, i32, i32
  }
  func.func @transform_1(%arg0: i32) -> (i32, i32) {
    %c0_i32 = arith.constant 0 : i32
    %c0_i32_0 = arith.constant 0 : i32
    %c0_i32_1 = arith.constant 0 : i32
    return %c0_i32, %c0_i32_0 : i32, i32
  }
  func.func @transform_2(%arg0: i32) -> (i32, i32) {
    %c0_i32 = arith.constant 0 : i32
    %c0_i32_0 = arith.constant 0 : i32
    %c0_i32_1 = arith.constant 0 : i32
    return %c0_i32, %c0_i32_0 : i32, i32
  }
  func.func @transform_3(%arg0: i32) -> (i32, i32, i32) {
    %c0_i32 = arith.constant 0 : i32
    %c0_i32_0 = arith.constant 0 : i32
    %c0_i32_1 = arith.constant 0 : i32
    return %arg0, %c0_i32, %c0_i32_0 : i32, i32, i32
  }
  func.func @transform_4(%arg0: i32) -> (i32, i32) {
    %c0_i32 = arith.constant 0 : i32
    %c0_i32_0 = arith.constant 0 : i32
    %c0_i32_1 = arith.constant 0 : i32
    return %c0_i32, %c0_i32_0 : i32, i32
  }
  func.func @transform_5(%arg0: i32) -> (i32, i32) {
    %c0_i32 = arith.constant 0 : i32
    %c0_i32_0 = arith.constant 0 : i32
    %c0_i32_1 = arith.constant 0 : i32
    return %c0_i32, %c0_i32_0 : i32, i32
  }
  func.func @transform_6(%arg0: i32) -> (i32, i32) {
    %c0_i32 = arith.constant 0 : i32
    %c0_i32_0 = arith.constant 0 : i32
    %c0_i32_1 = arith.constant 0 : i32
    return %c0_i32, %c0_i32_0 : i32, i32
  }
  func.func @transform_7(%arg0: i32) -> (i32, i32) {
    %c0_i32 = arith.constant 0 : i32
    %c0_i32_0 = arith.constant 0 : i32
    %c0_i32_1 = arith.constant 0 : i32
    return %c0_i32, %c0_i32_0 : i32, i32
  }
  func.func @transform_8(%arg0: i32) -> (i32, i32, i32) {
    %c0_i32 = arith.constant 0 : i32
    %c0_i32_0 = arith.constant 0 : i32
    %c0_i32_1 = arith.constant 0 : i32
    return %arg0, %c0_i32, %c0_i32_0 : i32, i32, i32
  }
}

</mosaic_0001>

<llo_original>
// kernel: tpu_custom_call.1
$region0: #{tpu_custom_call.1}
  #allocation0 [shape = 'u32[]', space=smem, size = 0x4, offset = 0x4, fixed_abs, tag = 'smem constant byte address 0x4 - core index']
  #allocation1 [shape = 'u32[72,128]{1,0:T(1,128)}', space=vmem, size = 0x9000, scoped, tag = 'internal scratch']
  #allocation2 [shape = 'f32[1,1]{1,0:T(1,128)S(1)}', space=vmem, size = 0x200, scoped, tag = 'scoped memory for tpu_custom_call.1']
  %s0 = inlined_call_operand.vmem [shape: f32[2,8,4], index: 0, kind: input, shape index: {}]
  %s1 = inlined_call_operand.vmem [shape: f32[4,32], index: 1, kind: input, shape index: {}]
  %s2 = inlined_call_operand.vmem [shape: f32[1,32], index: 2, kind: input, shape index: {}]
  %s3 = inlined_call_operand.vmem [shape: f32[2,8,1], index: 3, kind: input, shape index: {}]
  %s4 = inlined_call_operand.vmem [shape: f32[1,32], index: 4, kind: input, shape index: {}]
  %s5 = inlined_call_operand.vmem [shape: f32[1,32], index: 5, kind: input, shape index: {}]
  %s6 = inlined_call_operand.vmem [shape: f32[1,32], index: 6, kind: input, shape index: {}]
  %s7 = inlined_call_operand.<no memory space> [shape: f32[1,1], index: 7, kind: input, shape index: {}]
  %s8 = inlined_call_operand.vmem [shape: f32[2,1,1], index: 8, kind: output, shape index: {}]
  %s9 = sld [smem:[#allocation0]]
  $region42: #{tpu_custom_call.1} parent=0
    _
  %s11 = ssub.s32 1, %s9
  %s12 = scalar_select 0, %s11, %s9
  %v13 = vstv %s7
  %14 = vst [vmem:[#allocation2] sm:$0x1] %v13
  // Predicated region
  $region2: #{tpu_custom_call.1} parent=0 // pred_check
    _
  $region3: #{tpu_custom_call.1} parent=0 // pred_check_branch
    %16 = sbr.rel (0) target = $region5
  $region4: #{tpu_custom_call.1} parent=0 // pred_region
    _
  $region5: #{tpu_custom_call.1} parent=0 // pred_fallthru
    _
  // Predicated region
  $region6: #{tpu_custom_call.1} parent=0 // pred_check
    _
  $region7: #{tpu_custom_call.1} parent=0 // pred_check_branch
    %18 = sbr.rel (0) target = $region9
  $region8: #{tpu_custom_call.1} parent=0 // pred_region
    _
  $region9: #{tpu_custom_call.1} parent=0 // pred_fallthru
    _
  // Predicated region
  $region10: #{tpu_custom_call.1} parent=0 // pred_check
    _
  $region11: #{tpu_custom_call.1} parent=0 // pred_check_branch
    %20 = sbr.rel (0) target = $region13
  $region12: #{tpu_custom_call.1} parent=0 // pred_region
    _
  $region13: #{tpu_custom_call.1} parent=0 // pred_fallthru
    _
  // Predicated region
  $region14: #{tpu_custom_call.1} parent=0 // pred_check
    _
  $region15: #{tpu_custom_call.1} parent=0 // pred_check_branch
    %22 = sbr.rel (0) target = $region17
  $region16: #{tpu_custom_call.1} parent=0 // pred_region
    _
  $region17: #{tpu_custom_call.1} parent=0 // pred_fallthru
    _
  // Predicated region
  $region18: #{tpu_custom_call.1} parent=0 // pred_check
    _
  $region19: #{tpu_custom_call.1} parent=0 // pred_check_branch
    %24 = sbr.rel (0) target = $region21
  $region20: #{tpu_custom_call.1} parent=0 // pred_region
    _
  $region21: #{tpu_custom_call.1} parent=0 // pred_fallthru
    _
  // Predicated region
  $region22: #{tpu_custom_call.1} parent=0 // pred_check
    _
  $region23: #{tpu_custom_call.1} parent=0 // pred_check_branch
    %26 = sbr.rel (0) target = $region25
  $region24: #{tpu_custom_call.1} parent=0 // pred_region
    _
  $region25: #{tpu_custom_call.1} parent=0 // pred_fallthru
    _
  // Predicated region
  $region26: #{tpu_custom_call.1} parent=0 // pred_check
    _
  $region27: #{tpu_custom_call.1} parent=0 // pred_check_branch
    %28 = sbr.rel (0) target = $region29
  $region28: #{tpu_custom_call.1} parent=0 // pred_region
    _
  $region29: #{tpu_custom_call.1} parent=0 // pred_fallthru
    _
  // Predicated region
  $region30: #{tpu_custom_call.1} parent=0 // pred_check
    _
  $region31: #{tpu_custom_call.1} parent=0 // pred_check_branch
    %30 = sbr.rel (0) target = $region33
  $region32: #{tpu_custom_call.1} parent=0 // pred_region
    _
  $region33: #{tpu_custom_call.1} parent=0 // pred_fallthru
    _
  %v31 = vld [vmem:[%s0] sm:$0xff]
  %v32 = vld [vmem:[%s0 + $0x8] sm:$0xff]
  %v33 = vld [vmem:[%s1] sm:$0xf]
  %v34 = vld [vmem:[%s2] sm:$0x1]
  %v36 = vperm.slane %v34, 0
  %vm38 = vcmask 31744
  %v40 = vsel %vm38, %v31, 0
  %v43 = vsel %vm38, %v32, 0
  %vm45 = vcmask 1043456
  %v47 = vsel %vm45, %v33, 0
  %49 = vmatpush.msra.mxu0 0.0
  %50 = vmatpush.msra.mxu0 0.0
  %51 = vmatpush.msra.mxu0 0.0
  %52 = vmatpush.msra.mxu0 0.0
  %53 = vmatpush.msra.mxu0 0.0
  %54 = vmatpush.msra.mxu0 0.0
  %55 = vmatpush.msra.mxu0 0.0
  %56 = vmatpush.msra.mxu0 0.0
  %57 = vmatpush.msra.mxu0 0.0
  %58 = vmatpush.msra.mxu0 0.0
  %59 = vmatpush.msra.mxu0 0.0
  %60 = vmatpush.msra.mxu0 0.0
  %61 = vmatpush.msra.mxu0 0.0
  %62 = vmatpush.msra.mxu0 0.0
  %63 = vmatpush.msra.mxu0 0.0
  %64 = vmatpush.msra.mxu0 %v47
  %65 = vmatmul.f32.gmra.mxu0 %v40
  %v66 = vpop.f32.mrf.mxu0
  %v67 = vadd.f32 %v36, %v66
  %68 = vmatmul.f32.gmra.mxu0 %v43
  %v69 = vpop.f32.mrf.mxu0
  %v70 = vadd.f32 %v36, %v69
  %71 = vdwg.mxu0
  %v72 = vld [vmem:[%s3] sm:$0xff]
  %v73 = vld [vmem:[%s3 + $0x8] sm:$0xff]
  %75 = vset.pattern.permute.xlu0 0
  %76 = vperm.xlu0 %75, %v72
  %v77 = vpop.permute.xlu0 %76
  %80 = vset.pattern.permute.xlu0 0
  %81 = vperm.xlu0 %80, %v73
  %v82 = vpop.permute.xlu0 %81
  %v84 = vmul.f32 %v67, %v77
  %v85 = vmul.f32 %v70, %v82
  %v86 = vld [vmem:[%s4] sm:$0x1]
  %v87 = vld [vmem:[%s5] sm:$0x1]
  %v88 = vld [vmem:[%s6] sm:$0x1]
  %v89 = vld [vmem:[#allocation2] sm:$0x1]
  %vm90 = vcmask 261120
  %v91 = vsel %vm90, %v84, 0.0
  %v92 = vrot.slane %v91, 4
  %v93 = vadd.f32 %v91, %v92
  %v94 = vrot.slane %v93, 2
  %v95 = vadd.f32 %v93, %v94
  %v96 = vrot.slane %v95, 1
  %v97 = vadd.f32 %v95, %v96
  %v98 = vsel %vm90, %v85, 0.0
  %v99 = vrot.slane %v98, 4
  %v100 = vadd.f32 %v98, %v99
  %v101 = vrot.slane %v100, 2
  %v102 = vadd.f32 %v100, %v101
  %v103 = vrot.slane %v102, 1
  %v104 = vadd.f32 %v102, %v103
  %v105 = vrcp.pop 8.0
  %v106 = vmul.f32 8.0, %v105
  %v107 = vsub.f32 1.0, %v106
  %v108 = vmul.f32 %v105, %v107
  %v109 = vadd.f32 %v105, %v108
  %vm110 = vweird.f32 %v105
  %v111 = vsel %vm110, %v105, %v109
  %v112 = vmul.f32 %v97, %v111
  %v113 = vmul.f32 %v104, %v111
  %vm116 = vcmask 1041409
  %v117 = vsel %vm116, %v113, %v112
  %vm119 = vcmask 254976
  %v120 = vsel %vm119, %v117, 0.0
  %121 = vadd.xlane.f32.xlu0 %v120
  %v122 = vpop.xlane.xlu0 %121
  %v123 = vrcp.pop 32.0
  %v124 = vmul.f32 32.0, %v123
  %v125 = vsub.f32 1.0, %v124
  %v126 = vmul.f32 %v123, %v125
  %v127 = vadd.f32 %v123, %v126
  %vm128 = vweird.f32 %v123
  %v129 = vsel %vm128, %v123, %v127
  %v130 = vmul.f32 %v122, %v129
  %v132 = vrot.slane %v130, 1
  %v135 = vsub.f32 %v112, %v130
  %v136 = vsub.f32 %v113, %v132
  %v137 = vmul.f32 %v135, %v135
  %v138 = vmul.f32 %v136, %v136
  %v141 = vrot.slane %v138, 7
  %v142 = vsel %vm116, %v141, %v137
  %v144 = vsel %vm119, %v142, 0.0
  %145 = vadd.xlane.f32.xlu0 %v144
  %v146 = vpop.xlane.xlu0 %145
  %v147 = vmul.f32 %v146, %v129
  %v148 = vadd.f32 %v147, 1e-05
  %v149 = vrsqrt.pop %v148
  %v150 = vmul.f32 %v149, %v148
  %v151 = vmul.f32 %v150, %v149
  %v152 = vmul.f32 0.5, %v151
  %v153 = vsub.f32 1.5, %v152
  %v154 = vmul.f32 %v149, %v153
  %vm155 = vweird.f32 %v148
  %vm156 = vweird.f32 %v149
  %vm157 = vmor %vm155, %vm156
  %v158 = vsel %vm157, %v149, %v154
  %v160 = vrot.slane %v158, 1
  %v163 = vmul.f32 %v135, %v158
  %v164 = vmul.f32 %v136, %v160
  %v166 = vperm.slane %v86, 0
  %v168 = vmul.f32 %v163, %v166
  %v169 = vmul.f32 %v164, %v166
  %v171 = vperm.slane %v87, 0
  %v173 = vadd.f32 %v168, %v171
  %v174 = vadd.f32 %v169, %v171
  %v176 = vperm.slane %v88, 0
  %v178 = vmul.f32 %v173, %v176
  %v179 = vmul.f32 %v174, %v176
  %v182 = vrot.slane %v179, 7
  %v183 = vsel %vm116, %v182, %v178
  %v185 = vsel %vm119, %v183, 0.0
  %186 = vadd.xlane.f32.xlu0 %v185
  %v187 = vpop.xlane.xlu0 %186
  %v189 = vperm.slane %v89, 0
  %v191 = vadd.f32 %v187, %v189
  %v193 = vrot.slane %v191, 1
  %vm195 = vcmask 0
  %196 = vst.msk [vmem:[%s8] sm:$0x1] %vm195, %v191
  %197 = vst.msk [vmem:[%s8 + $0x1] sm:$0x1] %vm195, %v193
  // Predicated region
  $region34: #{tpu_custom_call.1} parent=0 // pred_check
    _
  $region35: #{tpu_custom_call.1} parent=0 // pred_check_branch
    %199 = sbr.rel (0) target = $region37
  $region36: #{tpu_custom_call.1} parent=0 // pred_region
    _
  $region37: #{tpu_custom_call.1} parent=0 // pred_fallthru
    _
  // Predicated region
  $region38: #{tpu_custom_call.1} parent=0 // pred_check
    _
  $region39: #{tpu_custom_call.1} parent=0 // pred_check_branch
    %201 = sbr.rel (0) target = $region41
  $region40: #{tpu_custom_call.1} parent=0 // pred_region
    _
  $region41: #{tpu_custom_call.1} parent=0 // pred_fallthru
    _

</llo_original>
